<compile_context>
chip_gen: v6e
topology: v6e:2x2x1
jax: 0.10.0
libtpu: 0.0.40
codegen_flags: <defaults>
</compile_context>

<pallas_src>
import jax
import jax.numpy as jnp
from jax import lax
from jax.experimental import pallas as pl
from jax.experimental.pallas import tpu as pltpu

# --- module hyper-parameters (defaults of DownSampleSig_sub.__init__) ---
CONV_F = 128            # conv1_num_filters
CONV_K = 32 * 2         # kernel_size = conv_ksize * 2 = 64
CONV_STRIDE = 3 + 1     # conv_stride + 1 = 4
CONV_PAD = 1
POOL_K = 32 * 2         # 64
POOL_STRIDE = 2 + 1     # 3
POOL_DIL = 2
LRELU_SLOPE = 0.02
BN_EPS = 1e-5


def _conv_out_len(L):
    return (L + 2 * CONV_PAD - CONV_K) // CONV_STRIDE + 1


def _pool_out_len(T):
    eff = POOL_DIL * (POOL_K - 1) + 1
    return (T - eff) // POOL_STRIDE + 1


def _kernel(patch_ref, w_ref, scale_ref, shift_ref, out_ref, pool_ref):
    # patch_ref: (1, Bn*T8, K) bf16    w_ref: (K, F) bf16 (sign(gamma) pre-folded)
    # scale_ref/shift_ref: (1, F) f32  out_ref: (Bn, TP_pad, F) f32
    # pool_ref:  (Bn, R8, F) f32 VMEM scratch staging the sliding-window maxima
    bn, tp_pad, f = out_ref.shape
    t8 = patch_ref.shape[1] // bn
    m_rows = t8 - POOL_DIL * (POOL_K - 1)          # valid window-start rows after the tree
    need = POOL_STRIDE * (tp_pad - 1) + 1          # scratch rows touched by the strided read
    rows = min(m_rows, need)

    # One tall MXU matmul: bf16 operands, f32 accumulation.
    conv = jnp.dot(patch_ref[0], w_ref[...], preferred_element_type=jnp.float32)

    # Un-flatten the batch (T8 % 16 == 0, minor dim unchanged -> layout preserving) and run
    # the dilated sliding-max doubling tree in bf16 (order-exact; even shifts keep the
    # 2-per-sublane packing aligned).  MaxPool1d(kernel=64, stride=3, dilation=2).
    m = conv.reshape(bn, t8, f).astype(jnp.bfloat16)
    for c in (1, 2, 4, 8, 16, 32):
        sh = POOL_DIL * c
        m = jnp.maximum(m[:, :-sh, :], m[:, sh:, :])   # (bn, t8 - 126, f) at the end

    # Stage window maxima once in VMEM, then pick window starts 0, 3, ..., 3*(tp_pad-1)
    # with a single strided load and write the result with a single dense store.
    pool_ref[:, :rows, :] = m[:, :rows, :].astype(jnp.float32)
    if rows < need:
        # these rows are only ever read into output padding rows (sliced off by wrapper)
        pool_ref[:, rows:need, :] = jnp.zeros((bn, need - rows, f), jnp.float32)
    sel = pool_ref[:, pl.ds(0, tp_pad, stride=POOL_STRIDE), :]

    # Eval-mode BatchNorm affine (|gamma|/sqrt(var+eps), shift) + LeakyReLU(0.02), applied
    # only to the pooled rows (monotone-safe because sign(gamma) lives inside w_ref).
    y = sel * scale_ref[...] + shift_ref[...]
    out_ref[...] = jnp.maximum(y, LRELU_SLOPE * y)


def downsample_sig_sub(x, w_kf, scale, shift, *, block_n=32, channels_last=True):
    """x: (N, 1, L) f32 -> (N, T_pool, F) f32 channels-last (or (N, F, T_pool))."""
    N, C, L = x.shape
    assert C == 1
    T = _conv_out_len(L)
    TP = _pool_out_len(T)
    K, F = w_kf.shape
    assert (K, F) == (CONV_K, CONV_F)
    # the dilated max-pool needs at least one full window in the conv output
    assert T >= POOL_DIL * (POOL_K - 1) + 1, "input too short for the dilated max-pool"
    # last selected pool window must stay inside the (unpadded) conv output, so the
    # zero-padded conv rows T..T8-1 can never leak into a selected window maximum
    assert POOL_STRIDE * (TP - 1) + POOL_DIL * (POOL_K - 1) + 1 <= T

    # Fold sign(gamma) into the conv weights: maxpool(scale*conv + shift) ==
    # |scale| * maxpool(sign(scale)*conv) + shift for either sign, and LeakyReLU is
    # monotone, so the affine + activation can run after the pool on far fewer rows.
    sgn = jnp.where(scale < 0, -1.0, 1.0).astype(jnp.float32)
    w_signed = (w_kf * sgn[None, :]).astype(jnp.bfloat16)
    scale_abs = jnp.abs(scale).reshape(1, F).astype(jnp.float32)
    shift2 = shift.reshape(1, F).astype(jnp.float32)

    # im2col without a gather HLO; the input is cast to bf16 FIRST so the 16x-expanded
    # patches array is only ever materialized in HBM as bf16 (channels-last (N, T, K)).
    patches = lax.conv_general_dilated_patches(
        x.astype(jnp.bfloat16), filter_shape=(CONV_K,), window_strides=(CONV_STRIDE,),
        padding=[(CONV_PAD, CONV_PAD)],
        dimension_numbers=("NCH", "OIH", "NHC"))              # (N, T, K) bf16

    # Rows per grid step: amortize the ~0.35 us fixed per-step overhead and grow the matmul
    # M dim, but keep an even number of steps (>= 4 when N allows) so v7x's two TensorCores
    # each get >= 2 pipelined steps (v5e/v6e have one TC; harmless there).
    Bn = max(1, min(block_n, pl.cdiv(N, 4)))
    G = pl.cdiv(N, Bn)
    if G > 1 and G % 2:
        G += 1
    N_pad = G * Bn
    # Pad conv time to a multiple of 16 so the in-kernel reshape stays layout-preserving
    # even for the bf16 (2-per-sublane packed) pool tree.
    T8 = ((T + 15) // 16) * 16
    TP_pad = ((TP + 7) // 8) * 8                              # full-sublane output tiles
    R8 = ((POOL_STRIDE * (TP_pad - 1) + 1 + 7) // 8) * 8      # scratch rows for the subsample

    patches = jnp.pad(patches, ((0, N_pad - N), (0, T8 - T), (0, 0)))
    patches = patches.reshape(G, Bn * T8, K)                  # free HBM reshape

    out = pl.pallas_call(
        _kernel,
        out_shape=jax.ShapeDtypeStruct((N_pad, TP_pad, F), jnp.float32),
        grid=(G,),
        in_specs=[
            pl.BlockSpec((1, Bn * T8, K), lambda g: (g, 0, 0)),
            pl.BlockSpec((K, F), lambda g: (0, 0)),
            pl.BlockSpec((1, F), lambda g: (0, 0)),
            pl.BlockSpec((1, F), lambda g: (0, 0)),
        ],
        out_specs=pl.BlockSpec((Bn, TP_pad, F), lambda g: (g, 0, 0)),
        scratch_shapes=[pltpu.VMEM((Bn, R8, F), jnp.float32)],
        compiler_params=pltpu.CompilerParams(
            dimension_semantics=("parallel",),
            vmem_limit_bytes=32 * 1024 * 1024),
    )(patches, w_signed, scale_abs, shift2)

    out = out[:N, :TP]                             # drop batch / pool padding
    if channels_last:
        return out                                 # (N, T_pool, F): lane-dense layout
    # PyTorch NCL layout (lane-sparse, last dim T_pool); fold into the consumer if possible.
    return jnp.transpose(out, (0, 2, 1))


def init_params(key):
    """Deterministic synthetic parameters matching the module's __init__ shapes."""
    kw, kb, kg, kbe, km, kv = jax.random.split(key, 6)
    fan_in = 1 * CONV_K
    fan_out = CONV_F * CONV_K
    bound = (6.0 / (fan_in + fan_out)) ** 0.5                 # xavier_uniform_
    w_oik = jax.random.uniform(kw, (CONV_F, 1, CONV_K), jnp.float32, -bound, bound)
    b_bound = 1.0 / (fan_in ** 0.5)                           # PyTorch default conv bias init
    bias = jax.random.uniform(kb, (CONV_F,), jnp.float32, -b_bound, b_bound)
    # non-trivial eval-mode BatchNorm1d running stats (incl. negative gamma) so the
    # sign-folded post-pool affine path is exercised
    gamma = jax.random.uniform(kg, (CONV_F,), jnp.float32, -1.5, 1.5)
    beta = 0.1 * jax.random.normal(kbe, (CONV_F,), jnp.float32)
    run_mean = 0.1 * jax.random.normal(km, (CONV_F,), jnp.float32)
    run_var = jax.random.uniform(kv, (CONV_F,), jnp.float32, 0.5, 2.0)
    scale = gamma / jnp.sqrt(run_var + BN_EPS)
    shift = beta + (bias - run_mean) * scale                  # fold conv bias into BN shift
    w_kf = jnp.transpose(w_oik[:, 0, :])                      # (K, F)
    return w_kf, scale, shift, w_oik


def reference(x, w_oik, scale, shift):
    """Pure-JAX reference of the same eval-mode forward, PyTorch NCL layout."""
    conv = lax.conv_general_dilated(
        x, w_oik, window_strides=(CONV_STRIDE,), padding=[(CONV_PAD, CONV_PAD)],
        dimension_numbers=("NCH", "OIH", "NCH"))
    y = conv * scale[None, :, None] + shift[None, :, None]
    y = jnp.where(y >= 0.0, y, LRELU_SLOPE * y)
    pooled = lax.reduce_window(
        y, -jnp.inf, lax.max,
        window_dimensions=(1, 1, POOL_K),
        window_strides=(1, 1, POOL_STRIDE),
        padding=[(0, 0), (0, 0), (0, 0)],
        window_dilation=(1, 1, POOL_DIL))
    return pooled


if __name__ == "__main__":
    key = jax.random.PRNGKey(0)
    kx, kp = jax.random.split(key)
    N, L = 8, 1024                    # small; L must give conv_out >= 127 for the pool
    x = jax.random.normal(kx, (N, 1, L), jnp.float32)
    w_kf, scale, shift, w_oik = init_params(kp)

    out = downsample_sig_sub(x, w_kf, scale, shift)          # (N, T_pool, F) channels-last
    out = jax.block_until_ready(out)

    ref = reference(x, w_oik, scale, shift)                  # (N, F, T_pool) PyTorch NCL
    ref_cl = jnp.transpose(ref, (0, 2, 1))                   # compare in channels-last
    err = float(jnp.max(jnp.abs(out - ref_cl)))
    if out.shape != ref_cl.shape or err > 5e-2:
        raise AssertionError(f"mismatch: shape={out.shape} vs {ref_cl.shape}, max_err={err}")
    print("KERNEL_OK")
</pallas_src>

<mosaic_0001>
module attributes {stable_mosaic.version = 11 : i64} {
  func.func @_kernel(%arg0: i32, %arg1: memref<1x512x64xbf16, #tpu.memory_space<vmem>>, %arg2: memref<64x128xbf16, #tpu.memory_space<vmem>>, %arg3: memref<1x128xf32, #tpu.memory_space<vmem>>, %arg4: memref<1x128xf32, #tpu.memory_space<vmem>>, %arg5: memref<2x40x128xf32, #tpu.memory_space<vmem>>, %arg6: memref<2x120x128xf32, #tpu.memory_space<vmem>>) attributes {dimension_semantics = [#tpu.dimension_semantics<parallel>], iteration_bounds = array<i64: 4>, scalar_prefetch = 0 : i64, scratch_operands = 1 : i64, tpu.core_type = #tpu.core_type<tc>, window_params = [{transform_indices = @transform_0, window_bounds = array<i64: 1, 512, 64>}, {pipeline_mode = #tpu.pipeline_mode<synchronous>, transform_indices = @transform_1, window_bounds = array<i64: 64, 128>}, {pipeline_mode = #tpu.pipeline_mode<synchronous>, transform_indices = @transform_2, window_bounds = array<i64: 1, 128>}, {pipeline_mode = #tpu.pipeline_mode<synchronous>, transform_indices = @transform_3, window_bounds = array<i64: 1, 128>}, {transform_indices = @transform_4, window_bounds = array<i64: 2, 40, 128>}]} {
    %c0 = arith.constant 0 : index
    %c0_0 = arith.constant 0 : index
    %c0_1 = arith.constant 0 : index
    %0 = vector.load %arg1[%c0, %c0_0, %c0_1] : memref<1x512x64xbf16, #tpu.memory_space<vmem>>, vector<1x512x64xbf16>
    %1 = vector.shape_cast %0 : vector<1x512x64xbf16> to vector<512x64xbf16>
    %c0_2 = arith.constant 0 : index
    %c0_3 = arith.constant 0 : index
    %2 = vector.load %arg2[%c0_2, %c0_3] : memref<64x128xbf16, #tpu.memory_space<vmem>>, vector<64x128xbf16>
    %cst = arith.constant dense<0.000000e+00> : vector<512x128xf32>
    %3 = tpu.matmul %1, %2, %cst {dimension_numbers = #tpu.dot_dimension_numbers<[1], [0], [0], [1], [0, 0, 1, 1], [], []>} : vector<512x64xbf16>, vector<64x128xbf16>, vector<512x128xf32> -> vector<512x128xf32>
    %4 = vector.shape_cast %3 : vector<512x128xf32> to vector<2x256x128xf32>
    %5 = arith.truncf %4 : vector<2x256x128xf32> to vector<2x256x128xbf16>
    %6 = vector.extract_strided_slice %5 {offsets = [0, 0, 0], sizes = [2, 254, 128], strides = [1, 1, 1]} : vector<2x256x128xbf16> to vector<2x254x128xbf16>
    %7 = vector.extract_strided_slice %5 {offsets = [0, 2, 0], sizes = [2, 254, 128], strides = [1, 1, 1]} : vector<2x256x128xbf16> to vector<2x254x128xbf16>
    %8 = arith.maximumf %6, %7 : vector<2x254x128xbf16>
    %9 = vector.extract_strided_slice %8 {offsets = [0, 0, 0], sizes = [2, 250, 128], strides = [1, 1, 1]} : vector<2x254x128xbf16> to vector<2x250x128xbf16>
    %10 = vector.extract_strided_slice %8 {offsets = [0, 4, 0], sizes = [2, 250, 128], strides = [1, 1, 1]} : vector<2x254x128xbf16> to vector<2x250x128xbf16>
    %11 = arith.maximumf %9, %10 : vector<2x250x128xbf16>
    %12 = vector.extract_strided_slice %11 {offsets = [0, 0, 0], sizes = [2, 242, 128], strides = [1, 1, 1]} : vector<2x250x128xbf16> to vector<2x242x128xbf16>
    %13 = vector.extract_strided_slice %11 {offsets = [0, 8, 0], sizes = [2, 242, 128], strides = [1, 1, 1]} : vector<2x250x128xbf16> to vector<2x242x128xbf16>
    %14 = arith.maximumf %12, %13 : vector<2x242x128xbf16>
    %15 = vector.extract_strided_slice %14 {offsets = [0, 0, 0], sizes = [2, 226, 128], strides = [1, 1, 1]} : vector<2x242x128xbf16> to vector<2x226x128xbf16>
    %16 = vector.extract_strided_slice %14 {offsets = [0, 16, 0], sizes = [2, 226, 128], strides = [1, 1, 1]} : vector<2x242x128xbf16> to vector<2x226x128xbf16>
    %17 = arith.maximumf %15, %16 : vector<2x226x128xbf16>
    %18 = vector.extract_strided_slice %17 {offsets = [0, 0, 0], sizes = [2, 194, 128], strides = [1, 1, 1]} : vector<2x226x128xbf16> to vector<2x194x128xbf16>
    %19 = vector.extract_strided_slice %17 {offsets = [0, 32, 0], sizes = [2, 194, 128], strides = [1, 1, 1]} : vector<2x226x128xbf16> to vector<2x194x128xbf16>
    %20 = arith.maximumf %18, %19 : vector<2x194x128xbf16>
    %21 = vector.extract_strided_slice %20 {offsets = [0, 0, 0], sizes = [2, 130, 128], strides = [1, 1, 1]} : vector<2x194x128xbf16> to vector<2x130x128xbf16>
    %22 = vector.extract_strided_slice %20 {offsets = [0, 64, 0], sizes = [2, 130, 128], strides = [1, 1, 1]} : vector<2x194x128xbf16> to vector<2x130x128xbf16>
    %23 = arith.maximumf %21, %22 : vector<2x130x128xbf16>
    %24 = vector.extract_strided_slice %23 {offsets = [0, 0, 0], sizes = [2, 118, 128], strides = [1, 1, 1]} : vector<2x130x128xbf16> to vector<2x118x128xbf16>
    %25 = arith.extf %24 : vector<2x118x128xbf16> to vector<2x118x128xf32>
    %c0_4 = arith.constant 0 : index
    %c0_5 = arith.constant 0 : index
    %c0_6 = arith.constant 0 : index
    %26 = vector.load %arg6[%c0_4, %c0_5, %c0_6] : memref<2x120x128xf32, #tpu.memory_space<vmem>>, vector<2x118x128xf32>
    tpu.vector_store %arg6[%c0_4, %c0_5, %c0_6], %25 {strides = array<i32>} : memref<2x120x128xf32, #tpu.memory_space<vmem>>, vector<2x118x128xf32>,
    %c0_7 = arith.constant 0 : index
    %c0_8 = arith.constant 0 : index
    %c0_9 = arith.constant 0 : index
    %27 = tpu.strided_load %arg6[%c0_7, %c0_8, %c0_9] {strides = array<i32: 1, 3, 1>} : memref<2x120x128xf32, #tpu.memory_space<vmem>>, vector<2x40x128xf32>
    %c0_10 = arith.constant 0 : index
    %c0_11 = arith.constant 0 : index
    %28 = vector.load %arg3[%c0_10, %c0_11] : memref<1x128xf32, #tpu.memory_space<vmem>>, vector<1x128xf32>
    %29 = vector.shape_cast %28 : vector<1x128xf32> to vector<1x1x128xf32>
    %30 = vector.broadcast %29 : vector<1x1x128xf32> to vector<2x40x128xf32>
    %31 = arith.mulf %27, %30 : vector<2x40x128xf32>
    %c0_12 = arith.constant 0 : index
    %c0_13 = arith.constant 0 : index
    %32 = vector.load %arg4[%c0_12, %c0_13] : memref<1x128xf32, #tpu.memory_space<vmem>>, vector<1x128xf32>
    %33 = vector.shape_cast %32 : vector<1x128xf32> to vector<1x1x128xf32>
    %34 = vector.broadcast %33 : vector<1x1x128xf32> to vector<2x40x128xf32>
    %35 = arith.addf %31, %34 : vector<2x40x128xf32>
    %cst_14 = arith.constant 2.000000e-02 : f32
    %36 = vector.broadcast %cst_14 : f32 to vector<2x40x128xf32>
    %37 = arith.mulf %36, %35 : vector<2x40x128xf32>
    %38 = arith.maximumf %35, %37 : vector<2x40x128xf32>
    %c0_15 = arith.constant 0 : index
    %c0_16 = arith.constant 0 : index
    %c0_17 = arith.constant 0 : index
    %39 = vector.load %arg5[%c0_15, %c0_16, %c0_17] : memref<2x40x128xf32, #tpu.memory_space<vmem>>, vector<2x40x128xf32>
    tpu.vector_store %arg5[%c0_15, %c0_16, %c0_17], %38 {strides = array<i32>} : memref<2x40x128xf32, #tpu.memory_space<vmem>>, vector<2x40x128xf32>,
    return
  }
  func.func @transform_0(%arg0: i32) -> (i32, i32, i32) {
    %c0_i32 = arith.constant 0 : i32
    %c0_i32_0 = arith.constant 0 : i32
    %c0_i32_1 = arith.constant 0 : i32
    return %arg0, %c0_i32, %c0_i32_0 : i32, i32, i32
  }
  func.func @transform_1(%arg0: i32) -> (i32, i32) {
    %c0_i32 = arith.constant 0 : i32
    %c0_i32_0 = arith.constant 0 : i32
    %c0_i32_1 = arith.constant 0 : i32
    return %c0_i32, %c0_i32_0 : i32, i32
  }
  func.func @transform_2(%arg0: i32) -> (i32, i32) {
    %c0_i32 = arith.constant 0 : i32
    %c0_i32_0 = arith.constant 0 : i32
    %c0_i32_1 = arith.constant 0 : i32
    return %c0_i32, %c0_i32_0 : i32, i32
  }
  func.func @transform_3(%arg0: i32) -> (i32, i32) {
    %c0_i32 = arith.constant 0 : i32
    %c0_i32_0 = arith.constant 0 : i32
    %c0_i32_1 = arith.constant 0 : i32
    return %c0_i32, %c0_i32_0 : i32, i32
  }
  func.func @transform_4(%arg0: i32) -> (i32, i32, i32) {
    %c0_i32 = arith.constant 0 : i32
    %c0_i32_0 = arith.constant 0 : i32
    %c0_i32_1 = arith.constant 0 : i32
    return %arg0, %c0_i32, %c0_i32_0 : i32, i32, i32
  }
}

</mosaic_0001>

<llo_original>
// kernel: tpu_custom_call.1
$region0: #{tpu_custom_call.1}
  #allocation0 [shape = 'u32[]', space=smem, size = 0x4, offset = 0x4, fixed_abs, tag = 'smem constant byte address 0x4 - core index']
  #allocation1 [shape = 'u32[144,128]{1,0:T(1,128)}', space=vmem, size = 0x12000, scoped, tag = 'internal scratch']
  #allocation2 [shape = 'f32[2,120,128]{2,1,0:T(8,128)}', space=vmem, size = 0x1e000, scoped, tag = 'scratch operand']
  %s0 = inlined_call_operand.vmem [shape: bf16[4,512,64], index: 0, kind: input, shape index: {}]
  %s1 = inlined_call_operand.vmem [shape: bf16[64,128], index: 1, kind: input, shape index: {}]
  %s2 = inlined_call_operand.vmem [shape: f32[1,128], index: 2, kind: input, shape index: {}]
  %s3 = inlined_call_operand.vmem [shape: f32[1,128], index: 3, kind: input, shape index: {}]
  %s4 = inlined_call_operand.hbm [shape: f32[8,40,128], index: 4, kind: output, shape index: {}]
  %s5 = sld [smem:[#allocation0]]
  $region49: #{tpu_custom_call.1} parent=0
    _
  %s7 = ssub.s32 1, %s5
  %s8 = scalar_select 0, %s7, %s5
  $region1: #{tpu_custom_call.1} parent=0
    #allocation3 [shape = 'u8[81920]{0}', space=vmem, size = 0x14000, scoped, tag = 'output window, operand 0']
    #allocation4 [shape = 's32[2]{0}', space=sflag, size = 0x8, scoped, tag = 'scoped memory for tpu_custom_call.1']
    %9 = vsyncpa [#allocation4], 0
    %s10 = scalar_lea.sflag [#allocation4], 1
    %11 = vsyncpa %s10, 0
    loop: start=0, step=1, limit=6
    $region2: #{tpu_custom_call.1} parent=1 // loop_pre_header
      _
    $region3: #{tpu_custom_call.1} parent=1 // loop_header
      %s13 = sphi 0, %s17
      %p14 = scmp.ge.s32.totalorder %s13, 6
      %s23 = sphi 0, %s25
      %s26 = sphi 0, %s23
      %s27 = sphi 0, %s26
      %s43 = sphi 0, %s27
      %s47 = sphi 0, %s47
      %s49 = sphi 0, %s47
      %s50 = sphi 0, %s49
      %s64 = sphi 0, %s50
      %s68 = sphi 0, %s68
      %s70 = sphi 0, %s68
      %s71 = sphi 0, %s70
      %s85 = sphi 0, %s71
      %s89 = sphi 0, %s89
      %s91 = sphi 0, %s89
      %s92 = sphi 0, %s91
      %s106 = sphi 0, %s92
      %s112 = sphi 0, %s114
      %s115 = sphi 0, %s112
      %s116 = sphi 0, %s115
      %s132 = sphi 0, %s116
    $region4: #{tpu_custom_call.1} parent=1 // loop_header_branch
      %16 = sbr.rel (%p14) target = $region8
    $region5: #{tpu_custom_call.1} parent=1 // loop_body
      %s18 = ssub.s32 %s13, 1
      %s19 = ssub.s32 %s13, 2
      %s20 = sadd.s32 %s13, 1
      %s21 = ssub.s32 %s13, %s20
      %p22 = scmp.eq.s32.totalorder %s21, 0
      %s24 = sadd.s32 %s23, 1
      %s25 = scalar_select %p22, %s23, %s24
      %p28 = pneg %p22
      %p29 = scmp.eq.s32.totalorder %s13, 3
      %p30 = por %p28, %p29
      %p31 = scmp.ne.s32.totalorder %s23, %s26
      %p32 = scmp.eq.s32.totalorder %s13, 0
      %p33 = por %p31, %p32
      %p34 = scmp.ne.s32.totalorder %s23, %s26
      %p35 = scmp.eq.s32.totalorder %s18, 3
      %p36 = por %p34, %p35
      %p37 = scmp.ne.s32.totalorder %s26, %s27
      %p38 = scmp.eq.s32.totalorder %s18, 0
      %p39 = por %p37, %p38
      %p40 = scmp.ne.s32.totalorder %s26, %s27
      %p41 = scmp.eq.s32.totalorder %s19, 3
      %p42 = por %p40, %p41
      %p44 = scmp.ne.s32.totalorder %s27, %s43
      %p45 = scmp.eq.s32.totalorder %s19, 0
      %p46 = por %p44, %p45
      %s48 = sadd.s32 %s47, 1
      %p51 = scmp.eq.s32.totalorder %s13, 3
      %p52 = scmp.ne.s32.totalorder %s47, %s49
      %p53 = scmp.eq.s32.totalorder %s13, 0
      %p54 = por %p52, %p53
      %p55 = scmp.ne.s32.totalorder %s47, %s49
      %p56 = scmp.eq.s32.totalorder %s18, 3
      %p57 = por %p55, %p56
      %p58 = scmp.ne.s32.totalorder %s49, %s50
      %p59 = scmp.eq.s32.totalorder %s18, 0
      %p60 = por %p58, %p59
      %p61 = scmp.ne.s32.totalorder %s49, %s50
      %p62 = scmp.eq.s32.totalorder %s19, 3
      %p63 = por %p61, %p62
      %p65 = scmp.ne.s32.totalorder %s50, %s64
      %p66 = scmp.eq.s32.totalorder %s19, 0
      %p67 = por %p65, %p66
      %s69 = sadd.s32 %s68, 1
      %p72 = scmp.eq.s32.totalorder %s13, 3
      %p73 = scmp.ne.s32.totalorder %s68, %s70
      %p74 = scmp.eq.s32.totalorder %s13, 0
      %p75 = por %p73, %p74
      %p76 = scmp.ne.s32.totalorder %s68, %s70
      %p77 = scmp.eq.s32.totalorder %s18, 3
      %p78 = por %p76, %p77
      %p79 = scmp.ne.s32.totalorder %s70, %s71
      %p80 = scmp.eq.s32.totalorder %s18, 0
      %p81 = por %p79, %p80
      %p82 = scmp.ne.s32.totalorder %s70, %s71
      %p83 = scmp.eq.s32.totalorder %s19, 3
      %p84 = por %p82, %p83
      %p86 = scmp.ne.s32.totalorder %s71, %s85
      %p87 = scmp.eq.s32.totalorder %s19, 0
      %p88 = por %p86, %p87
      %s90 = sadd.s32 %s89, 1
      %p93 = scmp.eq.s32.totalorder %s13, 3
      %p94 = scmp.ne.s32.totalorder %s89, %s91
      %p95 = scmp.eq.s32.totalorder %s13, 0
      %p96 = por %p94, %p95
      %p97 = scmp.ne.s32.totalorder %s89, %s91
      %p98 = scmp.eq.s32.totalorder %s18, 3
      %p99 = por %p97, %p98
      %p100 = scmp.ne.s32.totalorder %s91, %s92
      %p101 = scmp.eq.s32.totalorder %s18, 0
      %p102 = por %p100, %p101
      %p103 = scmp.ne.s32.totalorder %s91, %s92
      %p104 = scmp.eq.s32.totalorder %s19, 3
      %p105 = por %p103, %p104
      %p107 = scmp.ne.s32.totalorder %s92, %s106
      %p108 = scmp.eq.s32.totalorder %s19, 0
      %p109 = por %p107, %p108
      %s110 = ssub.s32 %s13, %s20
      %p111 = scmp.eq.s32.totalorder %s110, 0
      %s113 = sadd.s32 %s112, 1
      %s114 = scalar_select %p111, %s112, %s113
      %p117 = pneg %p111
      %p118 = scmp.eq.s32.totalorder %s13, 3
      %p119 = por %p117, %p118
      %p120 = scmp.ne.s32.totalorder %s112, %s115
      %p121 = scmp.eq.s32.totalorder %s13, 0
      %p122 = por %p120, %p121
      %p123 = scmp.ne.s32.totalorder %s112, %s115
      %p124 = scmp.eq.s32.totalorder %s18, 3
      %p125 = por %p123, %p124
      %p126 = scmp.ne.s32.totalorder %s115, %s116
      %p127 = scmp.eq.s32.totalorder %s18, 0
      %p128 = por %p126, %p127
      %p129 = scmp.ne.s32.totalorder %s115, %s116
      %p130 = scmp.eq.s32.totalorder %s19, 3
      %p131 = por %p129, %p130
      %p133 = scmp.ne.s32.totalorder %s116, %s132
      %p134 = scmp.eq.s32.totalorder %s19, 0
      %p135 = por %p133, %p134
      %p136 = scmp.le.s32.totalorder 1, %s13
      %p137 = scmp.lt.s32.totalorder %s13, 5
      %p138 = pnand %p136, %p137
      %p139 = pneg %p138
      // Predicated region
      $region9: #{tpu_custom_call.1} parent=5 // pred_check
        _
      $region10: #{tpu_custom_call.1} parent=5 // pred_check_branch
        %141 = sbr.rel (%p138) target = $region12
      $region11: #{tpu_custom_call.1} parent=5 // pred_region
        %s142 = ssub.s32 %s13, 1
        // Predicated region
        $region13: #{tpu_custom_call.1} parent=11 // pred_check
          %p143 = pneg %p60
        $region14: #{tpu_custom_call.1} parent=11 // pred_check_branch
          %145 = sbr.rel (%p143) target = $region16
        $region15: #{tpu_custom_call.1} parent=11 // pred_region
          _
        $region16: #{tpu_custom_call.1} parent=11 // pred_fallthru
          _
        // Predicated region
        $region17: #{tpu_custom_call.1} parent=11 // pred_check
          %p146 = pneg %p81
        $region18: #{tpu_custom_call.1} parent=11 // pred_check_branch
          %148 = sbr.rel (%p146) target = $region20
        $region19: #{tpu_custom_call.1} parent=11 // pred_region
          _
        $region20: #{tpu_custom_call.1} parent=11 // pred_fallthru
          _
        // Predicated region
        $region21: #{tpu_custom_call.1} parent=11 // pred_check
          %p149 = pneg %p102
        $region22: #{tpu_custom_call.1} parent=11 // pred_check_branch
          %151 = sbr.rel (%p149) target = $region24
        $region23: #{tpu_custom_call.1} parent=11 // pred_region
          _
        $region24: #{tpu_custom_call.1} parent=11 // pred_fallthru
          _
      $region12: #{tpu_custom_call.1} parent=5 // pred_fallthru
        _
      %p152 = scmp.lt.s32.totalorder %s13, 4
      // Predicated region
      $region25: #{tpu_custom_call.1} parent=5 // pred_check
        %p153 = pneg %p152
      $region26: #{tpu_custom_call.1} parent=5 // pred_check_branch
        %155 = sbr.rel (%p153) target = $region28
      $region27: #{tpu_custom_call.1} parent=5 // pred_region
        // Predicated region
        $region29: #{tpu_custom_call.1} parent=27 // pred_check
          %p156 = pneg %p33
        $region30: #{tpu_custom_call.1} parent=27 // pred_check_branch
          %158 = sbr.rel (%p156) target = $region32
        $region31: #{tpu_custom_call.1} parent=27 // pred_region
          %p159 = scmp.lt.s32.totalorder %s13, 3
          %s160 = scalar_select %p159, %s13, 3
          %s161 = smul.addr %s160, 64
          %s162 = smul.addr %s161, 4
          %s163 = scalar_lea.vmem %s0, %s162
        $region32: #{tpu_custom_call.1} parent=27 // pred_fallthru
          _
      $region28: #{tpu_custom_call.1} parent=5 // pred_fallthru
        _
      %p164 = scmp.le.s32.totalorder 1, %s13
      %p165 = scmp.lt.s32.totalorder %s13, 5
      %p166 = pnand %p164, %p165
      %p167 = pneg %p166
      // Predicated region
      $region33: #{tpu_custom_call.1} parent=5 // pred_check
        _
      $region34: #{tpu_custom_call.1} parent=5 // pred_check_branch
        %169 = sbr.rel (%p166) target = $region36
      $region35: #{tpu_custom_call.1} parent=5 // pred_region
        %s170 = ssub.s32 %s13, 1
        %p171 = scmp.lt.s32.totalorder %s18, 3
        %s172 = scalar_select %p171, %s18, 3
        %s173 = smul.addr %s172, 64
        %s174 = smul.addr %s173, 4
        %s175 = scalar_lea.vmem %s0, %s174
        %p176 = pneg %p39
        %p177 = pneg %p36
        %p178 = pneg %p60
        %p179 = pneg %p57
        %p180 = pneg %p81
        %p181 = pneg %p78
        %p182 = pneg %p102
        %p183 = pneg %p99
        %p184 = pneg %p128
        %p185 = pneg %p125
        %s186 = sand.u32 %s115, 1
        %s187 = scalar_lea.sflag [#allocation4], %s186
        %s188 = sand.u32 %s115, 1
        %s189 = smul.addr %s188, 80
        %s190 = scalar_lea.vmem [#allocation3], %s189
        %p191 = scmp.lt.s32.totalorder %s18, 3
        %s192 = scalar_select %p191, %s18, 3
        %s193 = smul.addr %s192, 64
        %s194 = smul.addr %s193, 4
        %s195 = scalar_lea.vmem %s0, %s194
        %s196 = smul.u32 2, %s18
        %v198 = vld [vmem:[%s195] sm:$0xf]
        %v199 = vld [vmem:[%s195 + $0x4] sm:$0xf]
        %v200 = vld [vmem:[%s195 + $0x8] sm:$0xf]
        %v201 = vld [vmem:[%s195 + $0xc] sm:$0xf]
        %v202 = vld [vmem:[%s195 + $0x10] sm:$0xf]
        %v203 = vld [vmem:[%s195 + $0x14] sm:$0xf]
        %v204 = vld [vmem:[%s195 + $0x18] sm:$0xf]
        %v205 = vld [vmem:[%s195 + $0x1c] sm:$0xf]
        %v206 = vld [vmem:[%s195 + $0x20] sm:$0xf]
        %v207 = vld [vmem:[%s195 + $0x24] sm:$0xf]
        %v208 = vld [vmem:[%s195 + $0x28] sm:$0xf]
        %v209 = vld [vmem:[%s195 + $0x2c] sm:$0xf]
        %v210 = vld [vmem:[%s195 + $0x30] sm:$0xf]
        %v211 = vld [vmem:[%s195 + $0x34] sm:$0xf]
        %v212 = vld [vmem:[%s195 + $0x38] sm:$0xf]
        %v213 = vld [vmem:[%s195 + $0x3c] sm:$0xf]
        %v214 = vld [vmem:[%s195 + $0x40] sm:$0xf]
        %v215 = vld [vmem:[%s195 + $0x44] sm:$0xf]
        %v216 = vld [vmem:[%s195 + $0x48] sm:$0xf]
        %v217 = vld [vmem:[%s195 + $0x4c] sm:$0xf]
        %v218 = vld [vmem:[%s195 + $0x50] sm:$0xf]
        %v219 = vld [vmem:[%s195 + $0x54] sm:$0xf]
        %v220 = vld [vmem:[%s195 + $0x58] sm:$0xf]
        %v221 = vld [vmem:[%s195 + $0x5c] sm:$0xf]
        %v222 = vld [vmem:[%s195 + $0x60] sm:$0xf]
        %v223 = vld [vmem:[%s195 + $0x64] sm:$0xf]
        %v224 = vld [vmem:[%s195 + $0x68] sm:$0xf]
        %v225 = vld [vmem:[%s195 + $0x6c] sm:$0xf]
        %v226 = vld [vmem:[%s195 + $0x70] sm:$0xf]
        %v227 = vld [vmem:[%s195 + $0x74] sm:$0xf]
        %v228 = vld [vmem:[%s195 + $0x78] sm:$0xf]
        %v229 = vld [vmem:[%s195 + $0x7c] sm:$0xf]
        %v230 = vld [vmem:[%s195 + $0x80] sm:$0xf]
        %v231 = vld [vmem:[%s195 + $0x84] sm:$0xf]
        %v232 = vld [vmem:[%s195 + $0x88] sm:$0xf]
        %v233 = vld [vmem:[%s195 + $0x8c] sm:$0xf]
        %v234 = vld [vmem:[%s195 + $0x90] sm:$0xf]
        %v235 = vld [vmem:[%s195 + $0x94] sm:$0xf]
        %v236 = vld [vmem:[%s195 + $0x98] sm:$0xf]
        %v237 = vld [vmem:[%s195 + $0x9c] sm:$0xf]
        %v238 = vld [vmem:[%s195 + $0xa0] sm:$0xf]
        %v239 = vld [vmem:[%s195 + $0xa4] sm:$0xf]
        %v240 = vld [vmem:[%s195 + $0xa8] sm:$0xf]
        %v241 = vld [vmem:[%s195 + $0xac] sm:$0xf]
        %v242 = vld [vmem:[%s195 + $0xb0] sm:$0xf]
        %v243 = vld [vmem:[%s195 + $0xb4] sm:$0xf]
        %v244 = vld [vmem:[%s195 + $0xb8] sm:$0xf]
        %v245 = vld [vmem:[%s195 + $0xbc] sm:$0xf]
        %v246 = vld [vmem:[%s195 + $0xc0] sm:$0xf]
        %v247 = vld [vmem:[%s195 + $0xc4] sm:$0xf]
        %v248 = vld [vmem:[%s195 + $0xc8] sm:$0xf]
        %v249 = vld [vmem:[%s195 + $0xcc] sm:$0xf]
        %v250 = vld [vmem:[%s195 + $0xd0] sm:$0xf]
        %v251 = vld [vmem:[%s195 + $0xd4] sm:$0xf]
        %v252 = vld [vmem:[%s195 + $0xd8] sm:$0xf]
        %v253 = vld [vmem:[%s195 + $0xdc] sm:$0xf]
        %v254 = vld [vmem:[%s195 + $0xe0] sm:$0xf]
        %v255 = vld [vmem:[%s195 + $0xe4] sm:$0xf]
        %v256 = vld [vmem:[%s195 + $0xe8] sm:$0xf]
        %v257 = vld [vmem:[%s195 + $0xec] sm:$0xf]
        %v258 = vld [vmem:[%s195 + $0xf0] sm:$0xf]
        %v259 = vld [vmem:[%s195 + $0xf4] sm:$0xf]
        %v260 = vld [vmem:[%s195 + $0xf8] sm:$0xf]
        %v261 = vld [vmem:[%s195 + $0xfc] sm:$0xf]
        %v262 = vld [vmem:[%s1] sm:$0xf]
        %v263 = vld [vmem:[%s1 + $0x4] sm:$0xf]
        %v264 = vld [vmem:[%s1 + $0x8] sm:$0xf]
        %v265 = vld [vmem:[%s1 + $0xc] sm:$0xf]
        %v266 = vld [vmem:[%s1 + $0x10] sm:$0xf]
        %v267 = vld [vmem:[%s1 + $0x14] sm:$0xf]
        %v268 = vld [vmem:[%s1 + $0x18] sm:$0xf]
        %v269 = vld [vmem:[%s1 + $0x1c] sm:$0xf]
        %v334 = vunpack.c.l.b16 %v198
        %v335 = vunpack.c.l.b16 %v199
        %v336 = vunpack.c.l.b16 %v200
        %v337 = vunpack.c.l.b16 %v201
        %v338 = vunpack.c.l.b16 %v202
        %v339 = vunpack.c.l.b16 %v203
        %v340 = vunpack.c.l.b16 %v204
        %v341 = vunpack.c.l.b16 %v205
        %v342 = vunpack.c.l.b16 %v206
        %v343 = vunpack.c.l.b16 %v207
        %v344 = vunpack.c.l.b16 %v208
        %v345 = vunpack.c.l.b16 %v209
        %v346 = vunpack.c.l.b16 %v210
        %v347 = vunpack.c.l.b16 %v211
        %v348 = vunpack.c.l.b16 %v212
        %v349 = vunpack.c.l.b16 %v213
        %v350 = vunpack.c.l.b16 %v214
        %v351 = vunpack.c.l.b16 %v215
        %v352 = vunpack.c.l.b16 %v216
        %v353 = vunpack.c.l.b16 %v217
        %v354 = vunpack.c.l.b16 %v218
        %v355 = vunpack.c.l.b16 %v219
        %v356 = vunpack.c.l.b16 %v220
        %v357 = vunpack.c.l.b16 %v221
        %v358 = vunpack.c.l.b16 %v222
        %v359 = vunpack.c.l.b16 %v223
        %v360 = vunpack.c.l.b16 %v224
        %v361 = vunpack.c.l.b16 %v225
        %v362 = vunpack.c.l.b16 %v226
        %v363 = vunpack.c.l.b16 %v227
        %v364 = vunpack.c.l.b16 %v228
        %v365 = vunpack.c.l.b16 %v229
        %v366 = vunpack.c.l.b16 %v230
        %v367 = vunpack.c.l.b16 %v231
        %v368 = vunpack.c.l.b16 %v232
        %v369 = vunpack.c.l.b16 %v233
        %v370 = vunpack.c.l.b16 %v234
        %v371 = vunpack.c.l.b16 %v235
        %v372 = vunpack.c.l.b16 %v236
        %v373 = vunpack.c.l.b16 %v237
        %v374 = vunpack.c.l.b16 %v238
        %v375 = vunpack.c.l.b16 %v239
        %v376 = vunpack.c.l.b16 %v240
        %v377 = vunpack.c.l.b16 %v241
        %v378 = vunpack.c.l.b16 %v242
        %v379 = vunpack.c.l.b16 %v243
        %v380 = vunpack.c.l.b16 %v244
        %v381 = vunpack.c.l.b16 %v245
        %v382 = vunpack.c.l.b16 %v246
        %v383 = vunpack.c.l.b16 %v247
        %v384 = vunpack.c.l.b16 %v248
        %v385 = vunpack.c.l.b16 %v249
        %v386 = vunpack.c.l.b16 %v250
        %v387 = vunpack.c.l.b16 %v251
        %v388 = vunpack.c.l.b16 %v252
        %v389 = vunpack.c.l.b16 %v253
        %v390 = vunpack.c.l.b16 %v254
        %v391 = vunpack.c.l.b16 %v255
        %v392 = vunpack.c.l.b16 %v256
        %v393 = vunpack.c.l.b16 %v257
        %v394 = vunpack.c.l.b16 %v258
        %v395 = vunpack.c.l.b16 %v259
        %v396 = vunpack.c.l.b16 %v260
        %v397 = vunpack.c.l.b16 %v261
        %v398 = vpack.c.b16 %v335, %v334
        %v399 = vpack.c.b16 %v337, %v336
        %v400 = vpack.c.b16 %v339, %v338
        %v401 = vpack.c.b16 %v341, %v340
        %v402 = vpack.c.b16 %v343, %v342
        %v403 = vpack.c.b16 %v345, %v344
        %v404 = vpack.c.b16 %v347, %v346
        %v405 = vpack.c.b16 %v349, %v348
        %v406 = vpack.c.b16 %v351, %v350
        %v407 = vpack.c.b16 %v353, %v352
        %v408 = vpack.c.b16 %v355, %v354
        %v409 = vpack.c.b16 %v357, %v356
        %v410 = vpack.c.b16 %v359, %v358
        %v411 = vpack.c.b16 %v361, %v360
        %v412 = vpack.c.b16 %v363, %v362
        %v413 = vpack.c.b16 %v365, %v364
        %v414 = vpack.c.b16 %v367, %v366
        %v415 = vpack.c.b16 %v369, %v368
        %v416 = vpack.c.b16 %v371, %v370
        %v417 = vpack.c.b16 %v373, %v372
        %v418 = vpack.c.b16 %v375, %v374
        %v419 = vpack.c.b16 %v377, %v376
        %v420 = vpack.c.b16 %v379, %v378
        %v421 = vpack.c.b16 %v381, %v380
        %v422 = vpack.c.b16 %v383, %v382
        %v423 = vpack.c.b16 %v385, %v384
        %v424 = vpack.c.b16 %v387, %v386
        %v425 = vpack.c.b16 %v389, %v388
        %v426 = vpack.c.b16 %v391, %v390
        %v427 = vpack.c.b16 %v393, %v392
        %v428 = vpack.c.b16 %v395, %v394
        %v429 = vpack.c.b16 %v397, %v396
        %v438 = vunpack.c.l.b16 %v262
        %v439 = vunpack.c.l.b16 %v263
        %v440 = vunpack.c.l.b16 %v264
        %v441 = vunpack.c.l.b16 %v265
        %v442 = vunpack.c.l.b16 %v266
        %v443 = vunpack.c.l.b16 %v267
        %v444 = vunpack.c.l.b16 %v268
        %v445 = vunpack.c.l.b16 %v269
        %v446 = vpack.c.b16 %v439, %v438
        %v447 = vpack.c.b16 %v441, %v440
        %v448 = vpack.c.b16 %v443, %v442
        %v449 = vpack.c.b16 %v445, %v444
        %vm454 = vcmask 523264
        %v456 = vsel %vm454, %v398, 0
        %v459 = vsel %vm454, %v399, 0
        %v462 = vsel %vm454, %v400, 0
        %v465 = vsel %vm454, %v401, 0
        %v468 = vsel %vm454, %v402, 0
        %v471 = vsel %vm454, %v403, 0
        %v474 = vsel %vm454, %v404, 0
        %v477 = vsel %vm454, %v405, 0
        %v480 = vsel %vm454, %v406, 0
        %v483 = vsel %vm454, %v407, 0
        %v486 = vsel %vm454, %v408, 0
        %v489 = vsel %vm454, %v409, 0
        %v492 = vsel %vm454, %v410, 0
        %v495 = vsel %vm454, %v411, 0
        %v498 = vsel %vm454, %v412, 0
        %v501 = vsel %vm454, %v413, 0
        %v504 = vsel %vm454, %v414, 0
        %v507 = vsel %vm454, %v415, 0
        %v510 = vsel %vm454, %v416, 0
        %v513 = vsel %vm454, %v417, 0
        %v516 = vsel %vm454, %v418, 0
        %v519 = vsel %vm454, %v419, 0
        %v522 = vsel %vm454, %v420, 0
        %v525 = vsel %vm454, %v421, 0
        %v528 = vsel %vm454, %v422, 0
        %v531 = vsel %vm454, %v423, 0
        %v534 = vsel %vm454, %v424, 0
        %v537 = vsel %vm454, %v425, 0
        %v540 = vsel %vm454, %v426, 0
        %v543 = vsel %vm454, %v427, 0
        %v546 = vsel %vm454, %v428, 0
        %v549 = vsel %vm454, %v429, 0
        %551 = vmatprep.subr.bf16.mxu0 0
        %552 = vmatpush1.bf16.msra.mxu0 0
        %553 = vmatprep.subr.bf16.mxu0 0
        %554 = vmatpush1.bf16.msra.mxu0 0
        %555 = vmatprep.subr.bf16.mxu0 0
        %556 = vmatpush1.bf16.msra.mxu0 0
        %557 = vmatprep.subr.bf16.mxu0 0
        %558 = vmatpush1.bf16.msra.mxu0 0
        %559 = vmatprep.subr.bf16.mxu0 0
        %560 = vmatpush1.bf16.msra.mxu0 %v449
        %561 = vmatprep.subr.bf16.mxu0 0
        %562 = vmatpush1.bf16.msra.mxu0 %v448
        %563 = vmatprep.subr.bf16.mxu0 0
        %564 = vmatpush1.bf16.msra.mxu0 %v447
        %565 = vmatprep.subr.bf16.mxu0 0
        %566 = vmatpush1.bf16.msra.mxu0 %v446
        %567 = vmatprep.subr.bf16.mxu0 0
        %568 = vmatpush2.bf16.msra.mxu0 0
        %569 = vmatprep.subr.bf16.mxu0 0
        %570 = vmatpush2.bf16.msra.mxu0 0
        %571 = vmatprep.subr.bf16.mxu0 0
        %572 = vmatpush2.bf16.msra.mxu0 0
        %573 = vmatprep.subr.bf16.mxu0 0
        %574 = vmatpush2.bf16.msra.mxu0 0
        %575 = vmatprep.subr.bf16.mxu0 0
        %576 = vmatpush2.bf16.msra.mxu0 0
        %577 = vmatprep.subr.bf16.mxu0 0
        %578 = vmatpush2.bf16.msra.mxu0 0
        %579 = vmatprep.subr.bf16.mxu0 0
        %580 = vmatpush2.bf16.msra.mxu0 0
        %581 = vmatprep.subr.bf16.mxu0 0
        %582 = vmatpush2.bf16.msra.mxu0 0
        %583 = vmatprep.mubr.bf16.mxu0 0
        %584 = vmatmul.mubr.bf16.gmra.mxu0 %v456
        %v585 = vpop.f32.mrf.mxu0
        %v586 = vadd.f32 0.0, %v585
        %v587 = vpop.f32.mrf.mxu0
        %v588 = vpop.f32.mrf.mxu0
        %v589 = vadd.f32 0.0, %v588
        %v590 = vpop.f32.mrf.mxu0
        %591 = vmatprep.mubr.bf16.mxu0 0
        %592 = vmatmul.mubr.bf16.gmra.mxu0 %v459
        %v593 = vpop.f32.mrf.mxu0
        %v594 = vadd.f32 0.0, %v593
        %v595 = vpop.f32.mrf.mxu0
        %v596 = vpop.f32.mrf.mxu0
        %v597 = vadd.f32 0.0, %v596
        %v598 = vpop.f32.mrf.mxu0
        %599 = vmatprep.mubr.bf16.mxu0 0
        %600 = vmatmul.mubr.bf16.gmra.mxu0 %v462
        %v601 = vpop.f32.mrf.mxu0
        %v602 = vadd.f32 0.0, %v601
        %v603 = vpop.f32.mrf.mxu0
        %v604 = vpop.f32.mrf.mxu0
        %v605 = vadd.f32 0.0, %v604
        %v606 = vpop.f32.mrf.mxu0
        %607 = vmatprep.mubr.bf16.mxu0 0
        %608 = vmatmul.mubr.bf16.gmra.mxu0 %v465
        %v609 = vpop.f32.mrf.mxu0
        %v610 = vadd.f32 0.0, %v609
        %v611 = vpop.f32.mrf.mxu0
        %v612 = vpop.f32.mrf.mxu0
        %v613 = vadd.f32 0.0, %v612
        %v614 = vpop.f32.mrf.mxu0
        %615 = vmatprep.mubr.bf16.mxu0 0
        %616 = vmatmul.mubr.bf16.gmra.mxu0 %v468
        %v617 = vpop.f32.mrf.mxu0
        %v618 = vadd.f32 0.0, %v617
        %v619 = vpop.f32.mrf.mxu0
        %v620 = vpop.f32.mrf.mxu0
        %v621 = vadd.f32 0.0, %v620
        %v622 = vpop.f32.mrf.mxu0
        %623 = vmatprep.mubr.bf16.mxu0 0
        %624 = vmatmul.mubr.bf16.gmra.mxu0 %v471
        %v625 = vpop.f32.mrf.mxu0
        %v626 = vadd.f32 0.0, %v625
        %v627 = vpop.f32.mrf.mxu0
        %v628 = vpop.f32.mrf.mxu0
        %v629 = vadd.f32 0.0, %v628
        %v630 = vpop.f32.mrf.mxu0
        %631 = vmatprep.mubr.bf16.mxu0 0
        %632 = vmatmul.mubr.bf16.gmra.mxu0 %v474
        %v633 = vpop.f32.mrf.mxu0
        %v634 = vadd.f32 0.0, %v633
        %v635 = vpop.f32.mrf.mxu0
        %v636 = vpop.f32.mrf.mxu0
        %v637 = vadd.f32 0.0, %v636
        %v638 = vpop.f32.mrf.mxu0
        %639 = vmatprep.mubr.bf16.mxu0 0
        %640 = vmatmul.mubr.bf16.gmra.mxu0 %v477
        %v641 = vpop.f32.mrf.mxu0
        %v642 = vadd.f32 0.0, %v641
        %v643 = vpop.f32.mrf.mxu0
        %v644 = vpop.f32.mrf.mxu0
        %v645 = vadd.f32 0.0, %v644
        %v646 = vpop.f32.mrf.mxu0
        %647 = vmatprep.mubr.bf16.mxu0 0
        %648 = vmatmul.mubr.bf16.gmra.mxu0 %v480
        %v649 = vpop.f32.mrf.mxu0
        %v650 = vadd.f32 0.0, %v649
        %v651 = vpop.f32.mrf.mxu0
        %v652 = vpop.f32.mrf.mxu0
        %v653 = vadd.f32 0.0, %v652
        %v654 = vpop.f32.mrf.mxu0
        %655 = vmatprep.mubr.bf16.mxu0 0
        %656 = vmatmul.mubr.bf16.gmra.mxu0 %v483
        %v657 = vpop.f32.mrf.mxu0
        %v658 = vadd.f32 0.0, %v657
        %v659 = vpop.f32.mrf.mxu0
        %v660 = vpop.f32.mrf.mxu0
        %v661 = vadd.f32 0.0, %v660
        %v662 = vpop.f32.mrf.mxu0
        %663 = vmatprep.mubr.bf16.mxu0 0
        %664 = vmatmul.mubr.bf16.gmra.mxu0 %v486
        %v665 = vpop.f32.mrf.mxu0
        %v666 = vadd.f32 0.0, %v665
        %v667 = vpop.f32.mrf.mxu0
        %v668 = vpop.f32.mrf.mxu0
        %v669 = vadd.f32 0.0, %v668
        %v670 = vpop.f32.mrf.mxu0
        %671 = vmatprep.mubr.bf16.mxu0 0
        %672 = vmatmul.mubr.bf16.gmra.mxu0 %v489
        %v673 = vpop.f32.mrf.mxu0
        %v674 = vadd.f32 0.0, %v673
        %v675 = vpop.f32.mrf.mxu0
        %v676 = vpop.f32.mrf.mxu0
        %v677 = vadd.f32 0.0, %v676
        %v678 = vpop.f32.mrf.mxu0
        %679 = vmatprep.mubr.bf16.mxu0 0
        %680 = vmatmul.mubr.bf16.gmra.mxu0 %v492
        %v681 = vpop.f32.mrf.mxu0
        %v682 = vadd.f32 0.0, %v681
        %v683 = vpop.f32.mrf.mxu0
        %v684 = vpop.f32.mrf.mxu0
        %v685 = vadd.f32 0.0, %v684
        %v686 = vpop.f32.mrf.mxu0
        %687 = vmatprep.mubr.bf16.mxu0 0
        %688 = vmatmul.mubr.bf16.gmra.mxu0 %v495
        %v689 = vpop.f32.mrf.mxu0
        %v690 = vadd.f32 0.0, %v689
        %v691 = vpop.f32.mrf.mxu0
        %v692 = vpop.f32.mrf.mxu0
        %v693 = vadd.f32 0.0, %v692
        %v694 = vpop.f32.mrf.mxu0
        %695 = vmatprep.mubr.bf16.mxu0 0
        %696 = vmatmul.mubr.bf16.gmra.mxu0 %v498
        %v697 = vpop.f32.mrf.mxu0
        %v698 = vadd.f32 0.0, %v697
        %v699 = vpop.f32.mrf.mxu0
        %v700 = vpop.f32.mrf.mxu0
        %v701 = vadd.f32 0.0, %v700
        %v702 = vpop.f32.mrf.mxu0
        %703 = vmatprep.mubr.bf16.mxu0 0
        %704 = vmatmul.mubr.bf16.gmra.mxu0 %v501
        %v705 = vpop.f32.mrf.mxu0
        %v706 = vadd.f32 0.0, %v705
        %v707 = vpop.f32.mrf.mxu0
        %v708 = vpop.f32.mrf.mxu0
        %v709 = vadd.f32 0.0, %v708
        %v710 = vpop.f32.mrf.mxu0
        %711 = vmatprep.mubr.bf16.mxu0 0
        %712 = vmatmul.mubr.bf16.gmra.mxu0 %v504
        %v713 = vpop.f32.mrf.mxu0
        %v714 = vadd.f32 0.0, %v713
        %v715 = vpop.f32.mrf.mxu0
        %v716 = vpop.f32.mrf.mxu0
        %v717 = vadd.f32 0.0, %v716
        %v718 = vpop.f32.mrf.mxu0
        %719 = vmatprep.mubr.bf16.mxu0 0
        %720 = vmatmul.mubr.bf16.gmra.mxu0 %v507
        %v721 = vpop.f32.mrf.mxu0
        %v722 = vadd.f32 0.0, %v721
        %v723 = vpop.f32.mrf.mxu0
        %v724 = vpop.f32.mrf.mxu0
        %v725 = vadd.f32 0.0, %v724
        %v726 = vpop.f32.mrf.mxu0
        %727 = vmatprep.mubr.bf16.mxu0 0
        %728 = vmatmul.mubr.bf16.gmra.mxu0 %v510
        %v729 = vpop.f32.mrf.mxu0
        %v730 = vadd.f32 0.0, %v729
        %v731 = vpop.f32.mrf.mxu0
        %v732 = vpop.f32.mrf.mxu0
        %v733 = vadd.f32 0.0, %v732
        %v734 = vpop.f32.mrf.mxu0
        %735 = vmatprep.mubr.bf16.mxu0 0
        %736 = vmatmul.mubr.bf16.gmra.mxu0 %v513
        %v737 = vpop.f32.mrf.mxu0
        %v738 = vadd.f32 0.0, %v737
        %v739 = vpop.f32.mrf.mxu0
        %v740 = vpop.f32.mrf.mxu0
        %v741 = vadd.f32 0.0, %v740
        %v742 = vpop.f32.mrf.mxu0
        %743 = vmatprep.mubr.bf16.mxu0 0
        %744 = vmatmul.mubr.bf16.gmra.mxu0 %v516
        %v745 = vpop.f32.mrf.mxu0
        %v746 = vadd.f32 0.0, %v745
        %v747 = vpop.f32.mrf.mxu0
        %v748 = vpop.f32.mrf.mxu0
        %v749 = vadd.f32 0.0, %v748
        %v750 = vpop.f32.mrf.mxu0
        %751 = vmatprep.mubr.bf16.mxu0 0
        %752 = vmatmul.mubr.bf16.gmra.mxu0 %v519
        %v753 = vpop.f32.mrf.mxu0
        %v754 = vadd.f32 0.0, %v753
        %v755 = vpop.f32.mrf.mxu0
        %v756 = vpop.f32.mrf.mxu0
        %v757 = vadd.f32 0.0, %v756
        %v758 = vpop.f32.mrf.mxu0
        %759 = vmatprep.mubr.bf16.mxu0 0
        %760 = vmatmul.mubr.bf16.gmra.mxu0 %v522
        %v761 = vpop.f32.mrf.mxu0
        %v762 = vadd.f32 0.0, %v761
        %v763 = vpop.f32.mrf.mxu0
        %v764 = vpop.f32.mrf.mxu0
        %v765 = vadd.f32 0.0, %v764
        %v766 = vpop.f32.mrf.mxu0
        %767 = vmatprep.mubr.bf16.mxu0 0
        %768 = vmatmul.mubr.bf16.gmra.mxu0 %v525
        %v769 = vpop.f32.mrf.mxu0
        %v770 = vadd.f32 0.0, %v769
        %v771 = vpop.f32.mrf.mxu0
        %v772 = vpop.f32.mrf.mxu0
        %v773 = vadd.f32 0.0, %v772
        %v774 = vpop.f32.mrf.mxu0
        %775 = vmatprep.mubr.bf16.mxu0 0
        %776 = vmatmul.mubr.bf16.gmra.mxu0 %v528
        %v777 = vpop.f32.mrf.mxu0
        %v778 = vadd.f32 0.0, %v777
        %v779 = vpop.f32.mrf.mxu0
        %v780 = vpop.f32.mrf.mxu0
        %v781 = vadd.f32 0.0, %v780
        %v782 = vpop.f32.mrf.mxu0
        %783 = vmatprep.mubr.bf16.mxu0 0
        %784 = vmatmul.mubr.bf16.gmra.mxu0 %v531
        %v785 = vpop.f32.mrf.mxu0
        %v786 = vadd.f32 0.0, %v785
        %v787 = vpop.f32.mrf.mxu0
        %v788 = vpop.f32.mrf.mxu0
        %v789 = vadd.f32 0.0, %v788
        %v790 = vpop.f32.mrf.mxu0
        %791 = vmatprep.mubr.bf16.mxu0 0
        %792 = vmatmul.mubr.bf16.gmra.mxu0 %v534
        %v793 = vpop.f32.mrf.mxu0
        %v794 = vadd.f32 0.0, %v793
        %v795 = vpop.f32.mrf.mxu0
        %v796 = vpop.f32.mrf.mxu0
        %v797 = vadd.f32 0.0, %v796
        %v798 = vpop.f32.mrf.mxu0
        %799 = vmatprep.mubr.bf16.mxu0 0
        %800 = vmatmul.mubr.bf16.gmra.mxu0 %v537
        %v801 = vpop.f32.mrf.mxu0
        %v802 = vadd.f32 0.0, %v801
        %v803 = vpop.f32.mrf.mxu0
        %v804 = vpop.f32.mrf.mxu0
        %v805 = vadd.f32 0.0, %v804
        %v806 = vpop.f32.mrf.mxu0
        %807 = vmatprep.mubr.bf16.mxu0 0
        %808 = vmatmul.mubr.bf16.gmra.mxu0 %v540
        %v809 = vpop.f32.mrf.mxu0
        %v810 = vadd.f32 0.0, %v809
        %v811 = vpop.f32.mrf.mxu0
        %v812 = vpop.f32.mrf.mxu0
        %v813 = vadd.f32 0.0, %v812
        %v814 = vpop.f32.mrf.mxu0
        %815 = vmatprep.mubr.bf16.mxu0 0
        %816 = vmatmul.mubr.bf16.gmra.mxu0 %v543
        %v817 = vpop.f32.mrf.mxu0
        %v818 = vadd.f32 0.0, %v817
        %v819 = vpop.f32.mrf.mxu0
        %v820 = vpop.f32.mrf.mxu0
        %v821 = vadd.f32 0.0, %v820
        %v822 = vpop.f32.mrf.mxu0
        %823 = vmatprep.mubr.bf16.mxu0 0
        %824 = vmatmul.mubr.bf16.gmra.mxu0 %v546
        %v825 = vpop.f32.mrf.mxu0
        %v826 = vadd.f32 0.0, %v825
        %v827 = vpop.f32.mrf.mxu0
        %v828 = vpop.f32.mrf.mxu0
        %v829 = vadd.f32 0.0, %v828
        %v830 = vpop.f32.mrf.mxu0
        %831 = vmatprep.mubr.bf16.mxu0 0
        %832 = vmatmul.mubr.bf16.gmra.mxu0 %v549
        %v833 = vpop.f32.mrf.mxu0
        %v834 = vadd.f32 0.0, %v833
        %v835 = vpop.f32.mrf.mxu0
        %v836 = vpop.f32.mrf.mxu0
        %v837 = vadd.f32 0.0, %v836
        %v838 = vpop.f32.mrf.mxu0
        %839 = vdwg.mxu0
        %v840 = vpack.c.bf16 %v589, %v586
        %v841 = vpack.c.bf16 %v597, %v594
        %v842 = vpack.c.bf16 %v605, %v602
        %v843 = vpack.c.bf16 %v613, %v610
        %v844 = vpack.c.bf16 %v621, %v618
        %v845 = vpack.c.bf16 %v629, %v626
        %v846 = vpack.c.bf16 %v637, %v634
        %v847 = vpack.c.bf16 %v645, %v642
        %v848 = vpack.c.bf16 %v653, %v650
        %v849 = vpack.c.bf16 %v661, %v658
        %v850 = vpack.c.bf16 %v669, %v666
        %v851 = vpack.c.bf16 %v677, %v674
        %v852 = vpack.c.bf16 %v685, %v682
        %v853 = vpack.c.bf16 %v693, %v690
        %v854 = vpack.c.bf16 %v701, %v698
        %v855 = vpack.c.bf16 %v709, %v706
        %v856 = vpack.c.bf16 %v717, %v714
        %v857 = vpack.c.bf16 %v725, %v722
        %v858 = vpack.c.bf16 %v733, %v730
        %v859 = vpack.c.bf16 %v741, %v738
        %v860 = vpack.c.bf16 %v749, %v746
        %v861 = vpack.c.bf16 %v757, %v754
        %v862 = vpack.c.bf16 %v765, %v762
        %v863 = vpack.c.bf16 %v773, %v770
        %v864 = vpack.c.bf16 %v781, %v778
        %v865 = vpack.c.bf16 %v789, %v786
        %v866 = vpack.c.bf16 %v797, %v794
        %v867 = vpack.c.bf16 %v805, %v802
        %v868 = vpack.c.bf16 %v813, %v810
        %v869 = vpack.c.bf16 %v821, %v818
        %v870 = vpack.c.bf16 %v829, %v826
        %v871 = vpack.c.bf16 %v837, %v834
        %vm904 = vcmask 1046528
        %v905 = vrot.slane %v840, 1
        %v906 = vrot.slane %v841, 1
        %v907 = vsel %vm904, %v905, %v906
        %v908 = vrot.slane %v842, 1
        %v909 = vsel %vm904, %v906, %v908
        %v910 = vrot.slane %v843, 1
        %v911 = vsel %vm904, %v908, %v910
        %v912 = vrot.slane %v844, 1
        %v913 = vsel %vm904, %v910, %v912
        %v914 = vrot.slane %v845, 1
        %v915 = vsel %vm904, %v912, %v914
        %v916 = vrot.slane %v846, 1
        %v917 = vsel %vm904, %v914, %v916
        %v918 = vrot.slane %v847, 1
        %v919 = vsel %vm904, %v916, %v918
        %v920 = vrot.slane %v848, 1
        %v921 = vsel %vm904, %v918, %v920
        %v922 = vrot.slane %v849, 1
        %v923 = vsel %vm904, %v920, %v922
        %v924 = vrot.slane %v850, 1
        %v925 = vsel %vm904, %v922, %v924
        %v926 = vrot.slane %v851, 1
        %v927 = vsel %vm904, %v924, %v926
        %v928 = vrot.slane %v852, 1
        %v929 = vsel %vm904, %v926, %v928
        %v930 = vrot.slane %v853, 1
        %v931 = vsel %vm904, %v928, %v930
        %v932 = vrot.slane %v854, 1
        %v933 = vsel %vm904, %v930, %v932
        %v934 = vrot.slane %v855, 1
        %v935 = vsel %vm904, %v932, %v934
        %v936 = vrot.slane %v856, 1
        %v937 = vrot.slane %v857, 1
        %v938 = vsel %vm904, %v936, %v937
        %v939 = vrot.slane %v858, 1
        %v940 = vsel %vm904, %v937, %v939
        %v941 = vrot.slane %v859, 1
        %v942 = vsel %vm904, %v939, %v941
        %v943 = vrot.slane %v860, 1
        %v944 = vsel %vm904, %v941, %v943
        %v945 = vrot.slane %v861, 1
        %v946 = vsel %vm904, %v943, %v945
        %v947 = vrot.slane %v862, 1
        %v948 = vsel %vm904, %v945, %v947
        %v949 = vrot.slane %v863, 1
        %v950 = vsel %vm904, %v947, %v949
        %v951 = vrot.slane %v864, 1
        %v952 = vsel %vm904, %v949, %v951
        %v953 = vrot.slane %v865, 1
        %v954 = vsel %vm904, %v951, %v953
        %v955 = vrot.slane %v866, 1
        %v956 = vsel %vm904, %v953, %v955
        %v957 = vrot.slane %v867, 1
        %v958 = vsel %vm904, %v955, %v957
        %v959 = vrot.slane %v868, 1
        %v960 = vsel %vm904, %v957, %v959
        %v961 = vrot.slane %v869, 1
        %v962 = vsel %vm904, %v959, %v961
        %v963 = vrot.slane %v870, 1
        %v964 = vsel %vm904, %v961, %v963
        %v965 = vrot.slane %v871, 1
        %v966 = vsel %vm904, %v963, %v965
        %v999 = vmax.bf16 %v840, %v907
        %v1000 = vmax.bf16 %v841, %v909
        %v1001 = vmax.bf16 %v842, %v911
        %v1002 = vmax.bf16 %v843, %v913
        %v1003 = vmax.bf16 %v844, %v915
        %v1004 = vmax.bf16 %v845, %v917
        %v1005 = vmax.bf16 %v846, %v919
        %v1006 = vmax.bf16 %v847, %v921
        %v1007 = vmax.bf16 %v848, %v923
        %v1008 = vmax.bf16 %v849, %v925
        %v1009 = vmax.bf16 %v850, %v927
        %v1010 = vmax.bf16 %v851, %v929
        %v1011 = vmax.bf16 %v852, %v931
        %v1012 = vmax.bf16 %v853, %v933
        %v1013 = vmax.bf16 %v854, %v935
        %v1014 = vmax.bf16 %v855, %v934
        %v1015 = vmax.bf16 %v856, %v938
        %v1016 = vmax.bf16 %v857, %v940
        %v1017 = vmax.bf16 %v858, %v942
        %v1018 = vmax.bf16 %v859, %v944
        %v1019 = vmax.bf16 %v860, %v946
        %v1020 = vmax.bf16 %v861, %v948
        %v1021 = vmax.bf16 %v862, %v950
        %v1022 = vmax.bf16 %v863, %v952
        %v1023 = vmax.bf16 %v864, %v954
        %v1024 = vmax.bf16 %v865, %v956
        %v1025 = vmax.bf16 %v866, %v958
        %v1026 = vmax.bf16 %v867, %v960
        %v1027 = vmax.bf16 %v868, %v962
        %v1028 = vmax.bf16 %v869, %v964
        %v1029 = vmax.bf16 %v870, %v966
        %v1030 = vmax.bf16 %v871, %v965
        %vm1063 = vcmask 1045504
        %v1064 = vrot.slane %v999, 2
        %v1065 = vrot.slane %v1000, 2
        %v1066 = vsel %vm1063, %v1064, %v1065
        %v1067 = vrot.slane %v1001, 2
        %v1068 = vsel %vm1063, %v1065, %v1067
        %v1069 = vrot.slane %v1002, 2
        %v1070 = vsel %vm1063, %v1067, %v1069
        %v1071 = vrot.slane %v1003, 2
        %v1072 = vsel %vm1063, %v1069, %v1071
        %v1073 = vrot.slane %v1004, 2
        %v1074 = vsel %vm1063, %v1071, %v1073
        %v1075 = vrot.slane %v1005, 2
        %v1076 = vsel %vm1063, %v1073, %v1075
        %v1077 = vrot.slane %v1006, 2
        %v1078 = vsel %vm1063, %v1075, %v1077
        %v1079 = vrot.slane %v1007, 2
        %v1080 = vsel %vm1063, %v1077, %v1079
        %v1081 = vrot.slane %v1008, 2
        %v1082 = vsel %vm1063, %v1079, %v1081
        %v1083 = vrot.slane %v1009, 2
        %v1084 = vsel %vm1063, %v1081, %v1083
        %v1085 = vrot.slane %v1010, 2
        %v1086 = vsel %vm1063, %v1083, %v1085
        %v1087 = vrot.slane %v1011, 2
        %v1088 = vsel %vm1063, %v1085, %v1087
        %v1089 = vrot.slane %v1012, 2
        %v1090 = vsel %vm1063, %v1087, %v1089
        %v1091 = vrot.slane %v1013, 2
        %v1092 = vsel %vm1063, %v1089, %v1091
        %v1093 = vrot.slane %v1014, 2
        %v1094 = vsel %vm1063, %v1091, %v1093
        %v1095 = vrot.slane %v1015, 2
        %v1096 = vrot.slane %v1016, 2
        %v1097 = vsel %vm1063, %v1095, %v1096
        %v1098 = vrot.slane %v1017, 2
        %v1099 = vsel %vm1063, %v1096, %v1098
        %v1100 = vrot.slane %v1018, 2
        %v1101 = vsel %vm1063, %v1098, %v1100
        %v1102 = vrot.slane %v1019, 2
        %v1103 = vsel %vm1063, %v1100, %v1102
        %v1104 = vrot.slane %v1020, 2
        %v1105 = vsel %vm1063, %v1102, %v1104
        %v1106 = vrot.slane %v1021, 2
        %v1107 = vsel %vm1063, %v1104, %v1106
        %v1108 = vrot.slane %v1022, 2
        %v1109 = vsel %vm1063, %v1106, %v1108
        %v1110 = vrot.slane %v1023, 2
        %v1111 = vsel %vm1063, %v1108, %v1110
        %v1112 = vrot.slane %v1024, 2
        %v1113 = vsel %vm1063, %v1110, %v1112
        %v1114 = vrot.slane %v1025, 2
        %v1115 = vsel %vm1063, %v1112, %v1114
        %v1116 = vrot.slane %v1026, 2
        %v1117 = vsel %vm1063, %v1114, %v1116
        %v1118 = vrot.slane %v1027, 2
        %v1119 = vsel %vm1063, %v1116, %v1118
        %v1120 = vrot.slane %v1028, 2
        %v1121 = vsel %vm1063, %v1118, %v1120
        %v1122 = vrot.slane %v1029, 2
        %v1123 = vsel %vm1063, %v1120, %v1122
        %v1124 = vrot.slane %v1030, 2
        %v1125 = vsel %vm1063, %v1122, %v1124
        %v1158 = vmax.bf16 %v999, %v1066
        %v1159 = vmax.bf16 %v1000, %v1068
        %v1160 = vmax.bf16 %v1001, %v1070
        %v1161 = vmax.bf16 %v1002, %v1072
        %v1162 = vmax.bf16 %v1003, %v1074
        %v1163 = vmax.bf16 %v1004, %v1076
        %v1164 = vmax.bf16 %v1005, %v1078
        %v1165 = vmax.bf16 %v1006, %v1080
        %v1166 = vmax.bf16 %v1007, %v1082
        %v1167 = vmax.bf16 %v1008, %v1084
        %v1168 = vmax.bf16 %v1009, %v1086
        %v1169 = vmax.bf16 %v1010, %v1088
        %v1170 = vmax.bf16 %v1011, %v1090
        %v1171 = vmax.bf16 %v1012, %v1092
        %v1172 = vmax.bf16 %v1013, %v1094
        %v1173 = vmax.bf16 %v1014, %v1093
        %v1174 = vmax.bf16 %v1015, %v1097
        %v1175 = vmax.bf16 %v1016, %v1099
        %v1176 = vmax.bf16 %v1017, %v1101
        %v1177 = vmax.bf16 %v1018, %v1103
        %v1178 = vmax.bf16 %v1019, %v1105
        %v1179 = vmax.bf16 %v1020, %v1107
        %v1180 = vmax.bf16 %v1021, %v1109
        %v1181 = vmax.bf16 %v1022, %v1111
        %v1182 = vmax.bf16 %v1023, %v1113
        %v1183 = vmax.bf16 %v1024, %v1115
        %v1184 = vmax.bf16 %v1025, %v1117
        %v1185 = vmax.bf16 %v1026, %v1119
        %v1186 = vmax.bf16 %v1027, %v1121
        %v1187 = vmax.bf16 %v1028, %v1123
        %v1188 = vmax.bf16 %v1029, %v1125
        %v1189 = vmax.bf16 %v1030, %v1124
        %vm1222 = vcmask 1043456
        %v1223 = vrot.slane %v1158, 4
        %v1224 = vrot.slane %v1159, 4
        %v1225 = vsel %vm1222, %v1223, %v1224
        %v1226 = vrot.slane %v1160, 4
        %v1227 = vsel %vm1222, %v1224, %v1226
        %v1228 = vrot.slane %v1161, 4
        %v1229 = vsel %vm1222, %v1226, %v1228
        %v1230 = vrot.slane %v1162, 4
        %v1231 = vsel %vm1222, %v1228, %v1230
        %v1232 = vrot.slane %v1163, 4
        %v1233 = vsel %vm1222, %v1230, %v1232
        %v1234 = vrot.slane %v1164, 4
        %v1235 = vsel %vm1222, %v1232, %v1234
        %v1236 = vrot.slane %v1165, 4
        %v1237 = vsel %vm1222, %v1234, %v1236
        %v1238 = vrot.slane %v1166, 4
        %v1239 = vsel %vm1222, %v1236, %v1238
        %v1240 = vrot.slane %v1167, 4
        %v1241 = vsel %vm1222, %v1238, %v1240
        %v1242 = vrot.slane %v1168, 4
        %v1243 = vsel %vm1222, %v1240, %v1242
        %v1244 = vrot.slane %v1169, 4
        %v1245 = vsel %vm1222, %v1242, %v1244
        %v1246 = vrot.slane %v1170, 4
        %v1247 = vsel %vm1222, %v1244, %v1246
        %v1248 = vrot.slane %v1171, 4
        %v1249 = vsel %vm1222, %v1246, %v1248
        %v1250 = vrot.slane %v1172, 4
        %v1251 = vsel %vm1222, %v1248, %v1250
        %v1252 = vrot.slane %v1173, 4
        %v1253 = vsel %vm1222, %v1250, %v1252
        %v1254 = vrot.slane %v1174, 4
        %v1255 = vrot.slane %v1175, 4
        %v1256 = vsel %vm1222, %v1254, %v1255
        %v1257 = vrot.slane %v1176, 4
        %v1258 = vsel %vm1222, %v1255, %v1257
        %v1259 = vrot.slane %v1177, 4
        %v1260 = vsel %vm1222, %v1257, %v1259
        %v1261 = vrot.slane %v1178, 4
        %v1262 = vsel %vm1222, %v1259, %v1261
        %v1263 = vrot.slane %v1179, 4
        %v1264 = vsel %vm1222, %v1261, %v1263
        %v1265 = vrot.slane %v1180, 4
        %v1266 = vsel %vm1222, %v1263, %v1265
        %v1267 = vrot.slane %v1181, 4
        %v1268 = vsel %vm1222, %v1265, %v1267
        %v1269 = vrot.slane %v1182, 4
        %v1270 = vsel %vm1222, %v1267, %v1269
        %v1271 = vrot.slane %v1183, 4
        %v1272 = vsel %vm1222, %v1269, %v1271
        %v1273 = vrot.slane %v1184, 4
        %v1274 = vsel %vm1222, %v1271, %v1273
        %v1275 = vrot.slane %v1185, 4
        %v1276 = vsel %vm1222, %v1273, %v1275
        %v1277 = vrot.slane %v1186, 4
        %v1278 = vsel %vm1222, %v1275, %v1277
        %v1279 = vrot.slane %v1187, 4
        %v1280 = vsel %vm1222, %v1277, %v1279
        %v1281 = vrot.slane %v1188, 4
        %v1282 = vsel %vm1222, %v1279, %v1281
        %v1283 = vrot.slane %v1189, 4
        %v1284 = vsel %vm1222, %v1281, %v1283
        %v1315 = vmax.bf16 %v1158, %v1225
        %v1316 = vmax.bf16 %v1159, %v1227
        %v1317 = vmax.bf16 %v1160, %v1229
        %v1318 = vmax.bf16 %v1161, %v1231
        %v1319 = vmax.bf16 %v1162, %v1233
        %v1320 = vmax.bf16 %v1163, %v1235
        %v1321 = vmax.bf16 %v1164, %v1237
        %v1322 = vmax.bf16 %v1165, %v1239
        %v1323 = vmax.bf16 %v1166, %v1241
        %v1324 = vmax.bf16 %v1167, %v1243
        %v1325 = vmax.bf16 %v1168, %v1245
        %v1326 = vmax.bf16 %v1169, %v1247
        %v1327 = vmax.bf16 %v1170, %v1249
        %v1328 = vmax.bf16 %v1171, %v1251
        %v1329 = vmax.bf16 %v1172, %v1253
        %v1330 = vmax.bf16 %v1174, %v1256
        %v1331 = vmax.bf16 %v1175, %v1258
        %v1332 = vmax.bf16 %v1176, %v1260
        %v1333 = vmax.bf16 %v1177, %v1262
        %v1334 = vmax.bf16 %v1178, %v1264
        %v1335 = vmax.bf16 %v1179, %v1266
        %v1336 = vmax.bf16 %v1180, %v1268
        %v1337 = vmax.bf16 %v1181, %v1270
        %v1338 = vmax.bf16 %v1182, %v1272
        %v1339 = vmax.bf16 %v1183, %v1274
        %v1340 = vmax.bf16 %v1184, %v1276
        %v1341 = vmax.bf16 %v1185, %v1278
        %v1342 = vmax.bf16 %v1186, %v1280
        %v1343 = vmax.bf16 %v1187, %v1282
        %v1344 = vmax.bf16 %v1188, %v1284
        %v1345 = vmax.bf16 %v1315, %v1316
        %v1346 = vmax.bf16 %v1316, %v1317
        %v1347 = vmax.bf16 %v1317, %v1318
        %v1348 = vmax.bf16 %v1318, %v1319
        %v1349 = vmax.bf16 %v1319, %v1320
        %v1350 = vmax.bf16 %v1320, %v1321
        %v1351 = vmax.bf16 %v1321, %v1322
        %v1352 = vmax.bf16 %v1322, %v1323
        %v1353 = vmax.bf16 %v1323, %v1324
        %v1354 = vmax.bf16 %v1324, %v1325
        %v1355 = vmax.bf16 %v1325, %v1326
        %v1356 = vmax.bf16 %v1326, %v1327
        %v1357 = vmax.bf16 %v1327, %v1328
        %v1358 = vmax.bf16 %v1328, %v1329
        %v1359 = vmax.bf16 %v1330, %v1331
        %v1360 = vmax.bf16 %v1331, %v1332
        %v1361 = vmax.bf16 %v1332, %v1333
        %v1362 = vmax.bf16 %v1333, %v1334
        %v1363 = vmax.bf16 %v1334, %v1335
        %v1364 = vmax.bf16 %v1335, %v1336
        %v1365 = vmax.bf16 %v1336, %v1337
        %v1366 = vmax.bf16 %v1337, %v1338
        %v1367 = vmax.bf16 %v1338, %v1339
        %v1368 = vmax.bf16 %v1339, %v1340
        %v1369 = vmax.bf16 %v1340, %v1341
        %v1370 = vmax.bf16 %v1341, %v1342
        %v1371 = vmax.bf16 %v1342, %v1343
        %v1372 = vmax.bf16 %v1343, %v1344
        %v1373 = vmax.bf16 %v1345, %v1347
        %v1374 = vmax.bf16 %v1346, %v1348
        %v1375 = vmax.bf16 %v1347, %v1349
        %v1376 = vmax.bf16 %v1348, %v1350
        %v1377 = vmax.bf16 %v1349, %v1351
        %v1378 = vmax.bf16 %v1350, %v1352
        %v1379 = vmax.bf16 %v1351, %v1353
        %v1380 = vmax.bf16 %v1352, %v1354
        %v1381 = vmax.bf16 %v1353, %v1355
        %v1382 = vmax.bf16 %v1354, %v1356
        %v1383 = vmax.bf16 %v1355, %v1357
        %v1384 = vmax.bf16 %v1356, %v1358
        %v1385 = vmax.bf16 %v1359, %v1361
        %v1386 = vmax.bf16 %v1360, %v1362
        %v1387 = vmax.bf16 %v1361, %v1363
        %v1388 = vmax.bf16 %v1362, %v1364
        %v1389 = vmax.bf16 %v1363, %v1365
        %v1390 = vmax.bf16 %v1364, %v1366
        %v1391 = vmax.bf16 %v1365, %v1367
        %v1392 = vmax.bf16 %v1366, %v1368
        %v1393 = vmax.bf16 %v1367, %v1369
        %v1394 = vmax.bf16 %v1368, %v1370
        %v1395 = vmax.bf16 %v1369, %v1371
        %v1396 = vmax.bf16 %v1370, %v1372
        %v1397 = vmax.bf16 %v1373, %v1377
        %v1398 = vmax.bf16 %v1374, %v1378
        %v1399 = vmax.bf16 %v1375, %v1379
        %v1400 = vmax.bf16 %v1376, %v1380
        %v1401 = vmax.bf16 %v1377, %v1381
        %v1402 = vmax.bf16 %v1378, %v1382
        %v1403 = vmax.bf16 %v1379, %v1383
        %v1404 = vmax.bf16 %v1380, %v1384
        %v1405 = vmax.bf16 %v1385, %v1389
        %v1406 = vmax.bf16 %v1386, %v1390
        %v1407 = vmax.bf16 %v1387, %v1391
        %v1408 = vmax.bf16 %v1388, %v1392
        %v1409 = vmax.bf16 %v1389, %v1393
        %v1410 = vmax.bf16 %v1390, %v1394
        %v1411 = vmax.bf16 %v1391, %v1395
        %v1412 = vmax.bf16 %v1392, %v1396
        %v1413 = vunpack.c.l.bf16 %v1397
        %v1414 = vunpack.c.h.bf16 %v1397
        %v1415 = vunpack.c.l.bf16 %v1398
        %v1416 = vunpack.c.h.bf16 %v1398
        %v1417 = vunpack.c.l.bf16 %v1399
        %v1418 = vunpack.c.h.bf16 %v1399
        %v1419 = vunpack.c.l.bf16 %v1400
        %v1420 = vunpack.c.h.bf16 %v1400
        %v1421 = vunpack.c.l.bf16 %v1401
        %v1422 = vunpack.c.h.bf16 %v1401
        %v1423 = vunpack.c.l.bf16 %v1402
        %v1424 = vunpack.c.h.bf16 %v1402
        %v1425 = vunpack.c.l.bf16 %v1403
        %v1426 = vunpack.c.h.bf16 %v1403
        %v1427 = vunpack.c.l.bf16 %v1404
        %v1428 = vunpack.c.l.bf16 %v1405
        %v1429 = vunpack.c.h.bf16 %v1405
        %v1430 = vunpack.c.l.bf16 %v1406
        %v1431 = vunpack.c.h.bf16 %v1406
        %v1432 = vunpack.c.l.bf16 %v1407
        %v1433 = vunpack.c.h.bf16 %v1407
        %v1434 = vunpack.c.l.bf16 %v1408
        %v1435 = vunpack.c.h.bf16 %v1408
        %v1436 = vunpack.c.l.bf16 %v1409
        %v1437 = vunpack.c.h.bf16 %v1409
        %v1438 = vunpack.c.l.bf16 %v1410
        %v1439 = vunpack.c.h.bf16 %v1410
        %v1440 = vunpack.c.l.bf16 %v1411
        %v1441 = vunpack.c.h.bf16 %v1411
        %v1442 = vunpack.c.l.bf16 %v1412
        %1443 = vst [vmem:[#allocation2] sm:$0xff] %v1413
        %1444 = vst [vmem:[#allocation2 + $0x8] sm:$0xff] %v1414
        %1445 = vst [vmem:[#allocation2 + $0x10] sm:$0xff] %v1415
        %1446 = vst [vmem:[#allocation2 + $0x18] sm:$0xff] %v1416
        %1447 = vst [vmem:[#allocation2 + $0x20] sm:$0xff] %v1417
        %1448 = vst [vmem:[#allocation2 + $0x28] sm:$0xff] %v1418
        %1449 = vst [vmem:[#allocation2 + $0x30] sm:$0xff] %v1419
        %1450 = vst [vmem:[#allocation2 + $0x38] sm:$0xff] %v1420
        %1451 = vst [vmem:[#allocation2 + $0x40] sm:$0xff] %v1421
        %1452 = vst [vmem:[#allocation2 + $0x48] sm:$0xff] %v1422
        %1453 = vst [vmem:[#allocation2 + $0x50] sm:$0xff] %v1423
        %1454 = vst [vmem:[#allocation2 + $0x58] sm:$0xff] %v1424
        %1455 = vst [vmem:[#allocation2 + $0x60] sm:$0xff] %v1425
        %1456 = vst [vmem:[#allocation2 + $0x68] sm:$0xff] %v1426
        %1457 = vst [vmem:[#allocation2 + $0x70] sm:$0x3f] %v1427
        %1458 = vst [vmem:[#allocation2 + $0x78] sm:$0xff] %v1428
        %1459 = vst [vmem:[#allocation2 + $0x80] sm:$0xff] %v1429
        %1460 = vst [vmem:[#allocation2 + $0x88] sm:$0xff] %v1430
        %1461 = vst [vmem:[#allocation2 + $0x90] sm:$0xff] %v1431
        %1462 = vst [vmem:[#allocation2 + $0x98] sm:$0xff] %v1432
        %1463 = vst [vmem:[#allocation2 + $0xa0] sm:$0xff] %v1433
        %1464 = vst [vmem:[#allocation2 + $0xa8] sm:$0xff] %v1434
        %1465 = vst [vmem:[#allocation2 + $0xb0] sm:$0xff] %v1435
        %1466 = vst [vmem:[#allocation2 + $0xb8] sm:$0xff] %v1436
        %1467 = vst [vmem:[#allocation2 + $0xc0] sm:$0xff] %v1437
        %1468 = vst [vmem:[#allocation2 + $0xc8] sm:$0xff] %v1438
        %1469 = vst [vmem:[#allocation2 + $0xd0] sm:$0xff] %v1439
        %1470 = vst [vmem:[#allocation2 + $0xd8] sm:$0xff] %v1440
        %1471 = vst [vmem:[#allocation2 + $0xe0] sm:$0xff] %v1441
        %1472 = vst [vmem:[#allocation2 + $0xe8] sm:$0x3f] %v1442
        %v1473 = vld [vmem:[#allocation2] ss:$3 sm:$0xff]
        %s1474 = scalar_lea.vmem [#allocation2], 24
        %v1475 = vld [vmem:[%s1474] ss:$3 sm:$0xff]
        %s1476 = scalar_lea.vmem [#allocation2], 48
        %v1477 = vld [vmem:[%s1476] ss:$3 sm:$0xff]
        %s1478 = scalar_lea.vmem [#allocation2], 72
        %v1479 = vld [vmem:[%s1478] ss:$3 sm:$0xff]
        %s1480 = scalar_lea.vmem [#allocation2], 96
        %v1481 = vld [vmem:[%s1480] ss:$3 sm:$0xff]
        %s1482 = scalar_lea.vmem [#allocation2], 120
        %v1483 = vld [vmem:[%s1482] ss:$3 sm:$0xff]
        %s1484 = scalar_lea.vmem [#allocation2], 144
        %v1485 = vld [vmem:[%s1484] ss:$3 sm:$0xff]
        %s1486 = scalar_lea.vmem [#allocation2], 168
        %v1487 = vld [vmem:[%s1486] ss:$3 sm:$0xff]
        %s1488 = scalar_lea.vmem [#allocation2], 192
        %v1489 = vld [vmem:[%s1488] ss:$3 sm:$0xff]
        %s1490 = scalar_lea.vmem [#allocation2], 216
        %v1491 = vld [vmem:[%s1490] ss:$3 sm:$0xff]
        %v1492 = vld [vmem:[%s2] sm:$0x1]
        %v1494 = vlaneseq
        %v1495 = vshrl.u32 %v1494, 7
        %v1496 = vsub.s32 0, %v1495
        %v1497 = vrot.slane %v1492, %v1496
        %v1499 = vmul.f32 %v1473, %v1497
        %v1500 = vmul.f32 %v1475, %v1497
        %v1501 = vmul.f32 %v1477, %v1497
        %v1502 = vmul.f32 %v1479, %v1497
        %v1503 = vmul.f32 %v1481, %v1497
        %v1504 = vmul.f32 %v1483, %v1497
        %v1505 = vmul.f32 %v1485, %v1497
        %v1506 = vmul.f32 %v1487, %v1497
        %v1507 = vmul.f32 %v1489, %v1497
        %v1508 = vmul.f32 %v1491, %v1497
        %v1509 = vld [vmem:[%s3] sm:$0x1]
        %v1511 = vlaneseq
        %v1512 = vshrl.u32 %v1511, 7
        %v1513 = vsub.s32 0, %v1512
        %v1514 = vrot.slane %v1509, %v1513
        %v1516 = vadd.f32 %v1499, %v1514
        %v1517 = vadd.f32 %v1500, %v1514
        %v1518 = vadd.f32 %v1501, %v1514
        %v1519 = vadd.f32 %v1502, %v1514
        %v1520 = vadd.f32 %v1503, %v1514
        %v1521 = vadd.f32 %v1504, %v1514
        %v1522 = vadd.f32 %v1505, %v1514
        %v1523 = vadd.f32 %v1506, %v1514
        %v1524 = vadd.f32 %v1507, %v1514
        %v1525 = vadd.f32 %v1508, %v1514
        %v1526 = vmul.f32 %v1516, 0.02
        %v1527 = vmul.f32 %v1517, 0.02
        %v1528 = vmul.f32 %v1518, 0.02
        %v1529 = vmul.f32 %v1519, 0.02
        %v1530 = vmul.f32 %v1520, 0.02
        %v1531 = vmul.f32 %v1521, 0.02
        %v1532 = vmul.f32 %v1522, 0.02
        %v1533 = vmul.f32 %v1523, 0.02
        %v1534 = vmul.f32 %v1524, 0.02
        %v1535 = vmul.f32 %v1525, 0.02
        %v1536 = vmax.f32 %v1516, %v1526
        %v1537 = vmax.f32 %v1517, %v1527
        %v1538 = vmax.f32 %v1518, %v1528
        %v1539 = vmax.f32 %v1519, %v1529
        %v1540 = vmax.f32 %v1520, %v1530
        %v1541 = vmax.f32 %v1521, %v1531
        %v1542 = vmax.f32 %v1522, %v1532
        %v1543 = vmax.f32 %v1523, %v1533
        %v1544 = vmax.f32 %v1524, %v1534
        %v1545 = vmax.f32 %v1525, %v1535
        %1546 = vst [vmem:[%s190] sm:$0xff] %v1536
        %1547 = vst [vmem:[%s190 + $0x8] sm:$0xff] %v1537
        %1548 = vst [vmem:[%s190 + $0x10] sm:$0xff] %v1538
        %1549 = vst [vmem:[%s190 + $0x18] sm:$0xff] %v1539
        %1550 = vst [vmem:[%s190 + $0x20] sm:$0xff] %v1540
        %1551 = vst [vmem:[%s190 + $0x28] sm:$0xff] %v1541
        %1552 = vst [vmem:[%s190 + $0x30] sm:$0xff] %v1542
        %1553 = vst [vmem:[%s190 + $0x38] sm:$0xff] %v1543
        %1554 = vst [vmem:[%s190 + $0x40] sm:$0xff] %v1544
        %1555 = vst [vmem:[%s190 + $0x48] sm:$0xff] %v1545
        %s1556 = sand.u32 %s115, 1
        %s1557 = scalar_lea.sflag [#allocation4], %s1556
        %s1558 = sand.u32 %s115, 1
        %s1559 = smul.addr %s1558, 80
        %s1560 = scalar_lea.vmem [#allocation3], %s1559
        // Predicated region
        $region37: #{tpu_custom_call.1} parent=35 // pred_check
          %p1561 = pneg %p125
        $region38: #{tpu_custom_call.1} parent=35 // pred_check_branch
          %1563 = sbr.rel (%p1561) target = $region40
        $region39: #{tpu_custom_call.1} parent=35 // pred_region
          %s1564 = smul.u32 2, %s18
          %s1566 = ssub.s32 1280, 1280
          %1567 = vsyncadd %s1557, %s1566
          %s1568 = smul.addr %s1564, 5
          %s1569 = smul.addr %s1568, 128
          %s1570 = scalar_lea.hbm %s4, %s1569
          %s1571 = sshll.u32 %s1560, 4
          %s1572 = int_to_ptr.vmem [resolvable:$true] %s1571
          %1577 = dma.vmem_to_hbm [thread:$0]  %s1572, 1280, %s1570, %s1557, 128, 128, 8
        $region40: #{tpu_custom_call.1} parent=35 // pred_fallthru
          _
      $region36: #{tpu_custom_call.1} parent=5 // pred_fallthru
        _
      %p1578 = scmp.le.s32.totalorder 2, %s13
      // Predicated region
      $region41: #{tpu_custom_call.1} parent=5 // pred_check
        %p1579 = pneg %p1578
      $region42: #{tpu_custom_call.1} parent=5 // pred_check_branch
        %1581 = sbr.rel (%p1579) target = $region44
      $region43: #{tpu_custom_call.1} parent=5 // pred_region
        %s1582 = ssub.s32 %s13, 2
        // Predicated region
        $region45: #{tpu_custom_call.1} parent=43 // pred_check
          %p1583 = pneg %p131
        $region46: #{tpu_custom_call.1} parent=43 // pred_check_branch
          %1585 = sbr.rel (%p1583) target = $region48
        $region47: #{tpu_custom_call.1} parent=43 // pred_region
          %s1586 = sand.u32 %s116, 1
          %s1587 = scalar_lea.sflag [#allocation4], %s1586
          %s1588 = sand.u32 %s116, 1
          %s1589 = smul.addr %s1588, 80
          %s1590 = scalar_lea.vmem [#allocation3], %s1589
          %1591 = dma.done %s1587, 1280
        $region48: #{tpu_custom_call.1} parent=43 // pred_fallthru
          _
      $region44: #{tpu_custom_call.1} parent=5 // pred_fallthru
        _
    $region6: #{tpu_custom_call.1} parent=1 // loop_footer
      %s17 = sadd.s32 1, %s13
    $region7: #{tpu_custom_call.1} parent=1 // loop_footer_branch
      %12 = sbr.rel target = $region3
    $region8: #{tpu_custom_call.1} parent=1 // loop_exit
      _
    %1592 = vsyncpa [#allocation4], 1
    %s1593 = scalar_lea.sflag [#allocation4], 1
    %1594 = vsyncpa %s1593, 1

</llo_original>
